<compile_context>
chip_gen: v5e
topology: v5e:2x2
jax: 0.10.0
libtpu: 0.0.40
codegen_flags: <defaults>
</compile_context>

<pallas_src>
import functools

import jax
import jax.numpy as jnp
from jax import lax
from jax.experimental import pallas as pl
from jax.experimental.pallas import tpu as pltpu

_LANE = 128
_EPS = 1e-8


def _tpu_generation_config():
    """Per-generation tile / VMEM / core-split configuration."""
    try:
        kind = jax.devices()[0].device_kind.lower()
    except Exception:  # pragma: no cover - defensive
        kind = ""
    if "v7" in kind or "7x" in kind:
        # v7x: 64 MiB VMEM per TC, 2 TCs per chip -> smaller tiles, real cross-core split.
        return dict(tile_bytes=2 << 20, vmem_limit=40 << 20, num_splits=2,
                    core_parallel=True)
    if "v5" in kind:
        # v5e: most memory-bound generation; 2 MiB tiles already sit near roofline.
        return dict(tile_bytes=2 << 20, vmem_limit=64 << 20, num_splits=1,
                    core_parallel=False)
    # v6e (and default): 128 MiB physical VMEM, single TensorCore.
    return dict(tile_bytes=4 << 20, vmem_limit=64 << 20, num_splits=1,
                core_parallel=False)


def _combined_loss_kernel(pred_ref, tgt_ref, pacbed_ref,
                          main_ref, pacbed_out_ref, stem_ref,
                          *, use_poisson, inv_b, nr, tr, bpc, needs_mask, two_axis):
    if two_axis:
        step = pl.program_id(1)
        blk = pl.program_id(0) * bpc + step
    else:
        step = pl.program_id(0)
        blk = step

    # Zero the resident accumulator outputs at the first step of each core's range.
    @pl.when(step == 0)
    def _init():
        main_ref[...] = jnp.zeros_like(main_ref)
        pacbed_out_ref[...] = jnp.zeros_like(pacbed_out_ref)
        stem_ref[...] = jnp.zeros_like(stem_ref)

    pred = pred_ref[...].astype(jnp.float32)       # (B, TR, 128)
    tgt = tgt_ref[...].astype(jnp.float32)         # (B, TR, 128)
    pac = pacbed_ref[...].astype(jnp.float32)      # (TR, 128)
    b, trr, lanes = pred.shape

    if needs_mask:
        # Ragged-row tail of the last (or duplicated/clamped) block: zero out invalid
        # rows via select (NOT multiply -- OOB block padding may hold garbage/inf).
        row = lax.broadcasted_iota(jnp.int32, (trr, 1), 0) + blk * tr
        valid2 = row < nr                          # (TR, 1)
        valid3 = valid2[None, :, :]                # (1, TR, 1)
        pred = jnp.where(valid3, pred, 0.0)
        pac = jnp.where(valid2, pac, 0.0)

    # --- main term (MSE during warmup, Poisson afterwards; selected at trace time) ---
    if use_poisson:
        pc = jnp.maximum(pred, _EPS)
        elem = tgt * jnp.log(pc) - pc              # sum(...) negated in the glue
    else:
        d = pred - tgt
        elem = d * d
    if needs_mask:
        elem = jnp.where(valid3, elem, 0.0)

    if trr >= 8:
        g = trr // 8                               # TR is a multiple of 8 by construction
        # Fold (B, TR, 128) -> (8, 128) with pure vreg-wise adds (no cross-lane work).
        main_ref[...] += elem.reshape(b * g, 8, lanes).sum(axis=0)

        # --- PACBED: batch-mean pattern vs target pattern (per-pixel, fully in-tile) ---
        psum = pred.sum(axis=0)                               # (TR, 128) vreg adds
        pdiff = psum * inv_b - pac                            # (TR, 128)
        pacbed_out_ref[...] += (pdiff * pdiff).reshape(g, 8, lanes).sum(axis=0)

        # --- STEM: per-sample partial pixel sums (lane/sublane reduce in the glue) ---
        stem_ref[...] += pred.reshape(b, g, 8, lanes).sum(axis=1)   # (B, 8, 128)
    else:
        # Tiny input: single full-dim block, accumulators keep the (TR, 128) footprint.
        main_ref[...] += elem.sum(axis=0)
        psum = pred.sum(axis=0)
        pdiff = psum * inv_b - pac
        pacbed_out_ref[...] += pdiff * pdiff
        stem_ref[...] += pred


def _loss_partials(pred3, tgt3, pac3, *, tr, num_splits, use_poisson, two_axis,
                   vmem_limit, core_parallel):
    B, nr, lanes = pred3.shape
    nblk = pl.cdiv(nr, tr)
    acc_rows = 8 if tr >= 8 else tr

    if two_axis:
        bpc = pl.cdiv(nblk, num_splits)
        grid = (num_splits, bpc)
        needs_mask = (num_splits * bpc * tr) != nr

        def rmap(c, i):
            # Clamp so no fully-out-of-bounds block DMA is ever issued; the in-kernel
            # row mask (driven by the *unclamped* block id) zeroes duplicated blocks.
            return jnp.minimum(c * bpc + i, nblk - 1)

        in_specs = [
            pl.BlockSpec((B, tr, lanes), lambda c, i: (0, rmap(c, i), 0)),
            pl.BlockSpec((B, tr, lanes), lambda c, i: (0, rmap(c, i), 0)),
            pl.BlockSpec((tr, lanes), lambda c, i: (rmap(c, i), 0)),
        ]
        out_specs = (
            pl.BlockSpec((None, acc_rows, lanes), lambda c, i: (c, 0, 0)),
            pl.BlockSpec((None, acc_rows, lanes), lambda c, i: (c, 0, 0)),
            pl.BlockSpec((None, B, acc_rows, lanes), lambda c, i: (c, 0, 0, 0)),
        )
        out_shape = (
            jax.ShapeDtypeStruct((num_splits, acc_rows, lanes), jnp.float32),
            jax.ShapeDtypeStruct((num_splits, acc_rows, lanes), jnp.float32),
            jax.ShapeDtypeStruct((num_splits, B, acc_rows, lanes), jnp.float32),
        )
        dims = ((pltpu.CORE_PARALLEL if core_parallel else pltpu.PARALLEL),
                pltpu.ARBITRARY)
        bpc_k = bpc
    else:
        grid = (nblk,)
        needs_mask = (nblk * tr) != nr
        in_specs = [
            pl.BlockSpec((B, tr, lanes), lambda i: (0, i, 0)),
            pl.BlockSpec((B, tr, lanes), lambda i: (0, i, 0)),
            pl.BlockSpec((tr, lanes), lambda i: (i, 0)),
        ]
        out_specs = (
            pl.BlockSpec((acc_rows, lanes), lambda i: (0, 0)),
            pl.BlockSpec((acc_rows, lanes), lambda i: (0, 0)),
            pl.BlockSpec((B, acc_rows, lanes), lambda i: (0, 0, 0)),
        )
        out_shape = (
            jax.ShapeDtypeStruct((acc_rows, lanes), jnp.float32),
            jax.ShapeDtypeStruct((acc_rows, lanes), jnp.float32),
            jax.ShapeDtypeStruct((B, acc_rows, lanes), jnp.float32),
        )
        dims = (pltpu.ARBITRARY,)
        bpc_k = nblk

    kernel = functools.partial(
        _combined_loss_kernel, use_poisson=use_poisson, inv_b=1.0 / B,
        nr=nr, tr=tr, bpc=bpc_k, needs_mask=needs_mask, two_axis=two_axis)

    elems = B * nr * lanes
    cost = pl.CostEstimate(
        flops=10 * elems,
        transcendentals=elems if use_poisson else 0,
        bytes_accessed=int(pred3.size * pred3.dtype.itemsize
                           + tgt3.size * tgt3.dtype.itemsize
                           + pac3.size * pac3.dtype.itemsize
                           + 4 * (2 + B) * acc_rows * lanes
                           * (num_splits if two_axis else 1)),
    )

    return pl.pallas_call(
        kernel,
        grid=grid,
        in_specs=in_specs,
        out_specs=out_specs,
        out_shape=out_shape,
        compiler_params=pltpu.CompilerParams(
            dimension_semantics=dims,
            vmem_limit_bytes=vmem_limit,
        ),
        cost_estimate=cost,
    )(pred3, tgt3, pac3)


@functools.partial(jax.jit, static_argnames=("current_epoch", "warmup_epochs",
                                             "pacbed_weight", "stem_weight",
                                             "force_num_splits"))
def combined_loss(predicted, target, target_pacbed, target_stem_sums, indices,
                  *, current_epoch=0, warmup_epochs=8,
                  pacbed_weight=0.02, stem_weight=0.01, force_num_splits=None):
    """Forward pass of CombinedLoss.

    predicted, target: (B, C, H, W) with C == 1 (as implied by the module's .squeeze()).
    target_pacbed:     (H, W)
    target_stem_sums:  (M,)  table of per-position STEM sums
    indices:           (B,)  int indices into target_stem_sums
    """
    poisson_weight = 1.0 - pacbed_weight - stem_weight
    use_poisson = current_epoch >= warmup_epochs

    B, C, H, W = predicted.shape
    assert C == 1, "CombinedLoss Pallas kernel assumes a single channel (C == 1)"
    N = C * H * W

    cfg = _tpu_generation_config()
    itemsize = max(predicted.dtype.itemsize, target.dtype.itemsize)
    row_mult = 8 * max(1, 4 // itemsize)          # packed sublanes: 8 f32 / 16 bf16 / 32 i8

    nr = pl.cdiv(N, _LANE)                        # lane-dense rows of 128 pixels
    lane_pad = nr * _LANE - N                     # only the very last row can be ragged

    # --- row-tile selection: ~tile_bytes per streamed operand, packed-sublane rows ----
    if nr < row_mult:
        tr = nr if nr < 8 else (nr // 8) * 8      # tiny input: (near-)full-dim block
    else:
        budget_rows = max(row_mult, cfg["tile_bytes"] // (B * _LANE * itemsize))
        tr = max(row_mult, (budget_rows // row_mult) * row_mult)
        tr = min(tr, (nr // row_mult) * row_mult)
    nblk = pl.cdiv(nr, tr)

    if force_num_splits is not None:
        num_splits = force_num_splits if nblk >= force_num_splits else 1
    else:
        num_splits = cfg["num_splits"] if nblk >= 2 * cfg["num_splits"] else 1
    two_axis = num_splits > 1

    # --- lane-dense layout, native dtype; no full-tensor pad unless N % 128 != 0 ------
    pred2 = predicted.reshape(B, N)
    tgt2 = target.reshape(B, N)
    pac2 = target_pacbed.reshape(-1)              # C == 1 (asserted above)
    if lane_pad:
        # TODO(synk): this fallback copies pred/target once in HBM; an in-kernel lane
        # mask on the last row would avoid it for N % 128 != 0 inputs.
        pred2 = jnp.pad(pred2, ((0, 0), (0, lane_pad)))
        tgt2 = jnp.pad(tgt2, ((0, 0), (0, lane_pad)))
        pac2 = jnp.pad(pac2, (0, lane_pad))
    pred3 = pred2.reshape(B, nr, _LANE)
    tgt3 = tgt2.reshape(B, nr, _LANE)
    pac3 = pac2.reshape(nr, _LANE)

    main_acc, pacbed_acc, stem_acc = _loss_partials(
        pred3, tgt3, pac3, tr=tr, num_splits=num_splits, use_poisson=use_poisson,
        two_axis=two_axis, vmem_limit=cfg["vmem_limit"],
        core_parallel=cfg["core_parallel"])

    # --- tiny epilogue reductions + weighting in plain JAX -----------------------------
    main_sum = jnp.sum(main_acc)
    pacbed_sq_sum = jnp.sum(pacbed_acc)
    if two_axis:
        pred_stem = jnp.sum(stem_acc, axis=(0, 2, 3))          # (B,)
    else:
        pred_stem = jnp.sum(stem_acc, axis=(1, 2))             # (B,)

    numel = B * N
    if use_poisson:
        if lane_pad:
            # Each zero-padded lane element contributes exactly -eps to the Poisson sum.
            main_sum = main_sum + _EPS * B * lane_pad
        main_loss = -main_sum / numel                          # STEM4D_PoissonLoss
    else:
        main_loss = main_sum / numel                           # nn.MSELoss() (mean)

    pacbed_loss = pacbed_sq_sum / N                            # F.mse_loss over (H, W)
    tgt_stem = jnp.take(target_stem_sums, indices, axis=0).astype(jnp.float32)
    stem_loss = jnp.mean((pred_stem - tgt_stem) ** 2)          # F.mse_loss over (B,)

    return (poisson_weight * main_loss
            + pacbed_weight * pacbed_loss
            + stem_weight * stem_loss)


def _reference(predicted, target, target_pacbed, target_stem_sums, indices,
               current_epoch, warmup_epochs=8, pacbed_weight=0.02, stem_weight=0.01):
    """Pure-JAX reference mirroring the PyTorch module, for sanity checking."""
    poisson_weight = 1.0 - pacbed_weight - stem_weight
    predicted = predicted.astype(jnp.float32)
    target = target.astype(jnp.float32)
    if current_epoch < warmup_epochs:
        main_loss = jnp.mean((predicted - target) ** 2)
    else:
        p = jnp.maximum(predicted, _EPS)
        main_loss = -jnp.sum(target * jnp.log(p) - p) / predicted.size
    pred_pacbed = jnp.squeeze(jnp.mean(predicted, axis=0))
    pacbed_loss = jnp.mean((pred_pacbed - target_pacbed.astype(jnp.float32)) ** 2)
    pred_stem = jnp.squeeze(jnp.sum(predicted, axis=(2, 3)))
    tgt_stem = target_stem_sums[indices].astype(jnp.float32)
    stem_loss = jnp.mean((pred_stem - tgt_stem) ** 2)
    return (poisson_weight * main_loss + pacbed_weight * pacbed_loss
            + stem_weight * stem_loss)


if __name__ == "__main__":
    key = jax.random.PRNGKey(0)
    k1, k2, k3, k4 = jax.random.split(key, 4)

    M = 8  # size of STEM-sum lookup table

    def _make(Hs, Ws, B=2):
        ks = jax.random.split(jax.random.fold_in(key, Hs), 4)
        pred = jax.random.uniform(ks[0], (B, 1, Hs, Ws), jnp.float32, 0.1, 2.0)
        tgt = jax.random.uniform(ks[1], (B, 1, Hs, Ws), jnp.float32, 0.1, 2.0)
        pac = jax.random.uniform(ks[2], (Hs, Ws), jnp.float32, 0.1, 2.0)
        stems = jax.random.uniform(ks[3], (M,), jnp.float32, 50.0, 300.0)
        idx = jnp.array([1, 5], dtype=jnp.int32)
        return pred, tgt, pac, stems, idx

    # --- Case 1: 16x16 (N divides 128 exactly; tiny single-block path) ----------------
    pred, tgt, pac, stems, idx = _make(16, 16)
    for ep in (0, 10):                 # warmup (MSE) branch and Poisson branch
        out = combined_loss(pred, tgt, pac, stems, idx, current_epoch=ep)
        jax.block_until_ready(out)
        ref = _reference(pred, tgt, pac, stems, idx, current_epoch=ep)
        assert jnp.allclose(out, ref, rtol=1e-5, atol=1e-5), (ep, out, ref)

    # --- Case 2: 40x40 (ragged rows -> in-kernel mask; ragged lanes -> small pad) -----
    pred, tgt, pac, stems, idx = _make(40, 40)
    for ep in (0, 10):
        out = combined_loss(pred, tgt, pac, stems, idx, current_epoch=ep)
        jax.block_until_ready(out)
        ref = _reference(pred, tgt, pac, stems, idx, current_epoch=ep)
        assert jnp.allclose(out, ref, rtol=1e-5, atol=1e-5), (ep, out, ref)

    # --- Case 3: exercise the split (two-axis grid) code path explicitly --------------
    out = combined_loss(pred, tgt, pac, stems, idx, current_epoch=10,
                        force_num_splits=2)
    jax.block_until_ready(out)
    ref = _reference(pred, tgt, pac, stems, idx, current_epoch=10)
    assert jnp.allclose(out, ref, rtol=1e-5, atol=1e-5), (out, ref)

    # --- Case 4: native bf16 streaming path (no wrapper upcast): runs and is finite ---
    pred, tgt, pac, stems, idx = _make(16, 16)
    out = combined_loss(pred.astype(jnp.bfloat16), tgt.astype(jnp.bfloat16),
                        pac.astype(jnp.bfloat16), stems, idx, current_epoch=10)
    jax.block_until_ready(out)
    assert bool(jnp.isfinite(out)), out

    print("KERNEL_OK")
</pallas_src>

<mosaic_0001>
module attributes {stable_mosaic.version = 11 : i64} {
  func.func @_combined_loss_kernel(%arg0: i32, %arg1: memref<2x2x128xf32, #tpu.memory_space<vmem>>, %arg2: memref<2x2x128xf32, #tpu.memory_space<vmem>>, %arg3: memref<2x128xf32, #tpu.memory_space<vmem>>, %arg4: memref<2x128xf32, #tpu.memory_space<vmem>>, %arg5: memref<2x128xf32, #tpu.memory_space<vmem>>, %arg6: memref<2x2x128xf32, #tpu.memory_space<vmem>>) attributes {dimension_semantics = [#tpu.dimension_semantics<arbitrary>], iteration_bounds = array<i64: 1>, scalar_prefetch = 0 : i64, scratch_operands = 0 : i64, tpu.core_type = #tpu.core_type<tc>, window_params = [{transform_indices = @transform_0, window_bounds = array<i64: 2, 2, 128>}, {transform_indices = @transform_1, window_bounds = array<i64: 2, 2, 128>}, {transform_indices = @transform_2, window_bounds = array<i64: 2, 128>}, {pipeline_mode = #tpu.pipeline_mode<synchronous>, transform_indices = @transform_3, window_bounds = array<i64: 2, 128>}, {pipeline_mode = #tpu.pipeline_mode<synchronous>, transform_indices = @transform_4, window_bounds = array<i64: 2, 128>}, {pipeline_mode = #tpu.pipeline_mode<synchronous>, transform_indices = @transform_5, window_bounds = array<i64: 2, 2, 128>}]} {
    %c0_i32 = arith.constant 0 : i32
    %0 = arith.cmpi eq, %arg0, %c0_i32 : i32
    %1 = arith.extui %0 : i1 to i32
    %c0_i32_0 = arith.constant 0 : i32
    %2 = arith.cmpi ne, %1, %c0_i32_0 : i32
    scf.if %2 {
      %cst_24 = arith.constant 0.000000e+00 : f32
      %23 = vector.broadcast %cst_24 : f32 to vector<2x128xf32>
      %c0_25 = arith.constant 0 : index
      %c0_26 = arith.constant 0 : index
      %24 = vector.load %arg4[%c0_25, %c0_26] : memref<2x128xf32, #tpu.memory_space<vmem>>, vector<2x128xf32>
      tpu.vector_store %arg4[%c0_25, %c0_26], %23 {strides = array<i32>} : memref<2x128xf32, #tpu.memory_space<vmem>>, vector<2x128xf32>,
      %cst_27 = arith.constant 0.000000e+00 : f32
      %25 = vector.broadcast %cst_27 : f32 to vector<2x128xf32>
      %c0_28 = arith.constant 0 : index
      %c0_29 = arith.constant 0 : index
      %26 = vector.load %arg5[%c0_28, %c0_29] : memref<2x128xf32, #tpu.memory_space<vmem>>, vector<2x128xf32>
      tpu.vector_store %arg5[%c0_28, %c0_29], %25 {strides = array<i32>} : memref<2x128xf32, #tpu.memory_space<vmem>>, vector<2x128xf32>,
      %cst_30 = arith.constant 0.000000e+00 : f32
      %27 = vector.broadcast %cst_30 : f32 to vector<2x2x128xf32>
      %c0_31 = arith.constant 0 : index
      %c0_32 = arith.constant 0 : index
      %c0_33 = arith.constant 0 : index
      %28 = vector.load %arg6[%c0_31, %c0_32, %c0_33] : memref<2x2x128xf32, #tpu.memory_space<vmem>>, vector<2x2x128xf32>
      tpu.vector_store %arg6[%c0_31, %c0_32, %c0_33], %27 {strides = array<i32>} : memref<2x2x128xf32, #tpu.memory_space<vmem>>, vector<2x2x128xf32>,
    } else {
    }
    %c0 = arith.constant 0 : index
    %c0_1 = arith.constant 0 : index
    %c0_2 = arith.constant 0 : index
    %3 = vector.load %arg1[%c0, %c0_1, %c0_2] : memref<2x2x128xf32, #tpu.memory_space<vmem>>, vector<2x2x128xf32>
    %c0_3 = arith.constant 0 : index
    %c0_4 = arith.constant 0 : index
    %c0_5 = arith.constant 0 : index
    %4 = vector.load %arg2[%c0_3, %c0_4, %c0_5] : memref<2x2x128xf32, #tpu.memory_space<vmem>>, vector<2x2x128xf32>
    %c0_6 = arith.constant 0 : index
    %c0_7 = arith.constant 0 : index
    %5 = vector.load %arg3[%c0_6, %c0_7] : memref<2x128xf32, #tpu.memory_space<vmem>>, vector<2x128xf32>
    %6 = arith.subf %3, %4 : vector<2x2x128xf32>
    %7 = arith.mulf %6, %6 : vector<2x2x128xf32>
    %c0_8 = arith.constant 0 : index
    %c0_9 = arith.constant 0 : index
    %8 = vector.load %arg4[%c0_8, %c0_9] : memref<2x128xf32, #tpu.memory_space<vmem>>, vector<2x128xf32>
    %cst = arith.constant dense<0.000000e+00> : vector<2x128xf32>
    %9 = vector.multi_reduction <add>, %7, %cst [0] : vector<2x2x128xf32> to vector<2x128xf32>
    %10 = arith.addf %8, %9 : vector<2x128xf32>
    %c0_10 = arith.constant 0 : index
    %c0_11 = arith.constant 0 : index
    %11 = vector.load %arg4[%c0_10, %c0_11] : memref<2x128xf32, #tpu.memory_space<vmem>>, vector<2x128xf32>
    tpu.vector_store %arg4[%c0_10, %c0_11], %10 {strides = array<i32>} : memref<2x128xf32, #tpu.memory_space<vmem>>, vector<2x128xf32>,
    %cst_12 = arith.constant dense<0.000000e+00> : vector<2x128xf32>
    %12 = vector.multi_reduction <add>, %3, %cst_12 [0] : vector<2x2x128xf32> to vector<2x128xf32>
    %cst_13 = arith.constant 5.000000e-01 : f32
    %13 = vector.broadcast %cst_13 : f32 to vector<2x128xf32>
    %14 = arith.mulf %12, %13 : vector<2x128xf32>
    %15 = arith.subf %14, %5 : vector<2x128xf32>
    %c0_14 = arith.constant 0 : index
    %c0_15 = arith.constant 0 : index
    %16 = vector.load %arg5[%c0_14, %c0_15] : memref<2x128xf32, #tpu.memory_space<vmem>>, vector<2x128xf32>
    %17 = arith.mulf %15, %15 : vector<2x128xf32>
    %18 = arith.addf %16, %17 : vector<2x128xf32>
    %c0_16 = arith.constant 0 : index
    %c0_17 = arith.constant 0 : index
    %19 = vector.load %arg5[%c0_16, %c0_17] : memref<2x128xf32, #tpu.memory_space<vmem>>, vector<2x128xf32>
    tpu.vector_store %arg5[%c0_16, %c0_17], %18 {strides = array<i32>} : memref<2x128xf32, #tpu.memory_space<vmem>>, vector<2x128xf32>,
    %c0_18 = arith.constant 0 : index
    %c0_19 = arith.constant 0 : index
    %c0_20 = arith.constant 0 : index
    %20 = vector.load %arg6[%c0_18, %c0_19, %c0_20] : memref<2x2x128xf32, #tpu.memory_space<vmem>>, vector<2x2x128xf32>
    %21 = arith.addf %20, %3 : vector<2x2x128xf32>
    %c0_21 = arith.constant 0 : index
    %c0_22 = arith.constant 0 : index
    %c0_23 = arith.constant 0 : index
    %22 = vector.load %arg6[%c0_21, %c0_22, %c0_23] : memref<2x2x128xf32, #tpu.memory_space<vmem>>, vector<2x2x128xf32>
    tpu.vector_store %arg6[%c0_21, %c0_22, %c0_23], %21 {strides = array<i32>} : memref<2x2x128xf32, #tpu.memory_space<vmem>>, vector<2x2x128xf32>,
    return
  }
  func.func @transform_0(%arg0: i32) -> (i32, i32, i32) {
    %c0_i32 = arith.constant 0 : i32
    %c0_i32_0 = arith.constant 0 : i32
    %c0_i32_1 = arith.constant 0 : i32
    return %c0_i32, %arg0, %c0_i32_0 : i32, i32, i32
  }
  func.func @transform_1(%arg0: i32) -> (i32, i32, i32) {
    %c0_i32 = arith.constant 0 : i32
    %c0_i32_0 = arith.constant 0 : i32
    %c0_i32_1 = arith.constant 0 : i32
    return %c0_i32, %arg0, %c0_i32_0 : i32, i32, i32
  }
  func.func @transform_2(%arg0: i32) -> (i32, i32) {
    %c0_i32 = arith.constant 0 : i32
    %c0_i32_0 = arith.constant 0 : i32
    return %arg0, %c0_i32 : i32, i32
  }
  func.func @transform_3(%arg0: i32) -> (i32, i32) {
    %c0_i32 = arith.constant 0 : i32
    %c0_i32_0 = arith.constant 0 : i32
    %c0_i32_1 = arith.constant 0 : i32
    return %c0_i32, %c0_i32_0 : i32, i32
  }
  func.func @transform_4(%arg0: i32) -> (i32, i32) {
    %c0_i32 = arith.constant 0 : i32
    %c0_i32_0 = arith.constant 0 : i32
    %c0_i32_1 = arith.constant 0 : i32
    return %c0_i32, %c0_i32_0 : i32, i32
  }
  func.func @transform_5(%arg0: i32) -> (i32, i32, i32) {
    %c0_i32 = arith.constant 0 : i32
    %c0_i32_0 = arith.constant 0 : i32
    %c0_i32_1 = arith.constant 0 : i32
    %c0_i32_2 = arith.constant 0 : i32
    return %c0_i32, %c0_i32_0, %c0_i32_1 : i32, i32, i32
  }
}

</mosaic_0001>

<llo_original>
// kernel: combined_loss.1
$region0: #{combined_loss.1}
  #allocation0 [shape = 'u32[]', space=smem, size = 0x4, offset = 0x4, fixed_abs, tag = 'smem constant byte address 0x4 - core index']
  #allocation1 [shape = 'u32[72,128]{1,0:T(1,128)}', space=vmem, size = 0x9000, scoped, tag = 'internal scratch']
  %s0 = inlined_call_operand.vmem [shape: f32[2,2,128], index: 0, kind: input, shape index: {}]
  %s1 = inlined_call_operand.vmem [shape: f32[2,2,128], index: 1, kind: input, shape index: {}]
  %s2 = inlined_call_operand.vmem [shape: f32[2,128], index: 2, kind: input, shape index: {}]
  %s3 = inlined_call_operand.vmem [shape: f32[2,128], index: 3, kind: output, shape index: {0}]
  %s4 = inlined_call_operand.vmem [shape: f32[2,128], index: 4, kind: output, shape index: {1}]
  %s5 = inlined_call_operand.vmem [shape: f32[2,2,128], index: 5, kind: output, shape index: {2}]
  %6 = xla_tuple %s3, %s4, %s5
  %s7 = sld [smem:[#allocation0]]
  $region42: #{combined_loss.1} parent=0
    _
  %s9 = ssub.s32 1, %s7
  %s10 = scalar_select 0, %s9, %s7
  // Predicated region
  $region2: #{combined_loss.1} parent=0 // pred_check
    _
  $region3: #{combined_loss.1} parent=0 // pred_check_branch
    %12 = sbr.rel (0) target = $region5
  $region4: #{combined_loss.1} parent=0 // pred_region
    _
  $region5: #{combined_loss.1} parent=0 // pred_fallthru
    _
  // Predicated region
  $region6: #{combined_loss.1} parent=0 // pred_check
    _
  $region7: #{combined_loss.1} parent=0 // pred_check_branch
    %14 = sbr.rel (0) target = $region9
  $region8: #{combined_loss.1} parent=0 // pred_region
    _
  $region9: #{combined_loss.1} parent=0 // pred_fallthru
    _
  // Predicated region
  $region10: #{combined_loss.1} parent=0 // pred_check
    _
  $region11: #{combined_loss.1} parent=0 // pred_check_branch
    %16 = sbr.rel (0) target = $region13
  $region12: #{combined_loss.1} parent=0 // pred_region
    _
  $region13: #{combined_loss.1} parent=0 // pred_fallthru
    _
  %p17 = scmp.eq.s32.totalorder 0, 0
  // Predicated region
  $region14: #{combined_loss.1} parent=0 // pred_check
    %p18 = pneg %p17
  $region15: #{combined_loss.1} parent=0 // pred_check_branch
    %20 = sbr.rel (%p18) target = $region17
  $region16: #{combined_loss.1} parent=0 // pred_region
    %21 = vst [vmem:[%s3] sm:$0x3] 0.0
    %22 = vst [vmem:[%s4] sm:$0x3] 0.0
    %23 = vst [vmem:[%s5] sm:$0x3] 0.0
    %24 = vst [vmem:[%s5 + $0x2] sm:$0x3] 0.0
  $region17: #{combined_loss.1} parent=0 // pred_fallthru
    _
  %v25 = vld [vmem:[%s0] sm:$0x3]
  %v26 = vld [vmem:[%s0 + $0x2] sm:$0x3]
  %v27 = vld [vmem:[%s1] sm:$0x3]
  %v28 = vld [vmem:[%s1 + $0x2] sm:$0x3]
  %v29 = vld [vmem:[%s2] sm:$0x3]
  %v30 = vsub.f32 %v25, %v27
  %v31 = vsub.f32 %v26, %v28
  %v32 = vmul.f32 %v30, %v30
  %v33 = vmul.f32 %v31, %v31
  %v34 = vld [vmem:[%s3] sm:$0x3]
  %vm35 = vcmask 1041408
  %v36 = vsel %vm35, %v32, 0.0
  %v37 = vsel %vm35, %v33, 0.0
  %v38 = vadd.f32 %v36, %v37
  %v39 = vadd.f32 %v34, %v38
  %40 = vst [vmem:[%s3] sm:$0x3] %v39
  %v41 = vsel %vm35, %v25, 0.0
  %v42 = vsel %vm35, %v26, 0.0
  %v43 = vadd.f32 %v41, %v42
  %v44 = vmul.f32 %v43, 0.5
  %v45 = vsub.f32 %v44, %v29
  %v46 = vld [vmem:[%s4] sm:$0x3]
  %v47 = vmul.f32 %v45, %v45
  %v48 = vadd.f32 %v46, %v47
  %49 = vst [vmem:[%s4] sm:$0x3] %v48
  %v50 = vld [vmem:[%s5] sm:$0x3]
  %v51 = vld [vmem:[%s5 + $0x2] sm:$0x3]
  %v52 = vadd.f32 %v50, %v25
  %v53 = vadd.f32 %v51, %v26
  %54 = vst [vmem:[%s5] sm:$0x3] %v52
  %55 = vst [vmem:[%s5 + $0x2] sm:$0x3] %v53
  // Predicated region
  $region18: #{combined_loss.1} parent=0 // pred_check
    _
  $region19: #{combined_loss.1} parent=0 // pred_check_branch
    %57 = sbr.rel (0) target = $region21
  $region20: #{combined_loss.1} parent=0 // pred_region
    _
  $region21: #{combined_loss.1} parent=0 // pred_fallthru
    _
  // Predicated region
  $region22: #{combined_loss.1} parent=0 // pred_check
    _
  $region23: #{combined_loss.1} parent=0 // pred_check_branch
    %59 = sbr.rel (0) target = $region25
  $region24: #{combined_loss.1} parent=0 // pred_region
    _
  $region25: #{combined_loss.1} parent=0 // pred_fallthru
    _
  // Predicated region
  $region26: #{combined_loss.1} parent=0 // pred_check
    _
  $region27: #{combined_loss.1} parent=0 // pred_check_branch
    %61 = sbr.rel (0) target = $region29
  $region28: #{combined_loss.1} parent=0 // pred_region
    _
  $region29: #{combined_loss.1} parent=0 // pred_fallthru
    _
  // Predicated region
  $region30: #{combined_loss.1} parent=0 // pred_check
    _
  $region31: #{combined_loss.1} parent=0 // pred_check_branch
    %63 = sbr.rel (0) target = $region33
  $region32: #{combined_loss.1} parent=0 // pred_region
    _
  $region33: #{combined_loss.1} parent=0 // pred_fallthru
    _
  // Predicated region
  $region34: #{combined_loss.1} parent=0 // pred_check
    _
  $region35: #{combined_loss.1} parent=0 // pred_check_branch
    %65 = sbr.rel (0) target = $region37
  $region36: #{combined_loss.1} parent=0 // pred_region
    _
  $region37: #{combined_loss.1} parent=0 // pred_fallthru
    _
  // Predicated region
  $region38: #{combined_loss.1} parent=0 // pred_check
    _
  $region39: #{combined_loss.1} parent=0 // pred_check_branch
    %67 = sbr.rel (0) target = $region41
  $region40: #{combined_loss.1} parent=0 // pred_region
    _
  $region41: #{combined_loss.1} parent=0 // pred_fallthru
    _

</llo_original>
